<compile_context>
chip_gen: v6e
topology: v6e:2x2x1
jax: 0.10.0
libtpu: 0.0.40
codegen_flags: <defaults>
</compile_context>

<pallas_src>
import functools

import jax
import jax.numpy as jnp
from jax.experimental import pallas as pl
from jax.experimental.pallas import tpu as pltpu


def _fold_cap():
    """Target sublane width nb*C (one native MXU weight tile)."""
    try:
        kind = jax.devices()[0].device_kind.lower()
    except Exception:
        return 256
    return 128 if "v5" in kind else 256


def _pick_fold(n, c, cap):
    """Largest nb dividing n with nb*c <= cap (fold nb images onto sublanes)."""
    nb = max(1, min(n, cap // c))
    while n % nb:
        nb -= 1
    return nb


def _pick_tile(hw, nbc, step_bytes=4 * 1024 * 1024):
    """Lane tile over HW: the full extent when one block is small enough,
    otherwise a multiple of 128 sized so one input block is ~step_bytes
    (>= 2-4 MiB per grid step keeps the ~0.35 us per-step overhead small and
    the double-buffered footprint within v7x's 64 MiB VMEM)."""
    if hw * nbc * 4 <= step_bytes:
        return hw
    t = max(128, (step_bytes // (nbc * 4)) // 128 * 128)
    return min(t, (hw // 128) * 128)


# ---------------------------------------------------------------------------
# Pass 1: batch statistics (folded per-channel sum and gram).
# Accumulators live directly in the output blocks (resident across the two
# "arbitrary" grid axes); one partial accumulator per TensorCore slice.
# ---------------------------------------------------------------------------
def _stats_kernel(x_ref, sum_ref, gram_ref, *, hw, tile, mask_tail):
    n = pl.program_id(1)
    j = pl.program_id(2)

    @pl.when((n == 0) & (j == 0))
    def _():
        sum_ref[...] = jnp.zeros_like(sum_ref)
        gram_ref[...] = jnp.zeros_like(gram_ref)

    x = x_ref[0].astype(jnp.float32)                       # (nb*C, tile)
    if mask_tail:
        # HW not a multiple of the lane tile: zero the padded tail lanes so
        # they do not pollute the statistics.
        lane = jax.lax.broadcasted_iota(jnp.int32, x.shape, 1) + j * tile
        x = jnp.where(lane < hw, x, 0.0)

    # Gram with the contraction on the lane axis of both operands -> MXU,
    # no materialized (C, tile) -> (tile, C) transpose.
    gram_ref[0] += jax.lax.dot_general(
        x, x, (((1,), (1,)), ((), ())), preferred_element_type=jnp.float32)
    # Per-channel sums: XLU lane reduce, rides a different slot than the MXU.
    sum_ref[0] += jnp.sum(x, axis=1, keepdims=True)


def _batch_stats(x3f, nb, C, tile, total_m):
    """x3f: (Nf, nb*C, HW) -> (mean (C,1), cov (C,C)) batch statistics (f32)."""
    Nf, nbC, HW = x3f.shape
    hwt = pl.cdiv(HW, tile)
    mask_tail = (HW % tile) != 0
    # Split the reduction across TensorCores along the folded-batch axis when
    # possible (leading "parallel" axis -> ~2x on v7x, harmless elsewhere).
    # TODO(synk): when Nf == 1 the stats pass stays on a single core; an HW-axis
    # split would need OOB-safe block clamping for the extra core's tail blocks.
    ncores = 2 if Nf % 2 == 0 else 1
    npc = Nf // ncores

    kern = functools.partial(_stats_kernel, hw=HW, tile=tile, mask_tail=mask_tail)
    s, gram = pl.pallas_call(
        kern,
        out_shape=(jax.ShapeDtypeStruct((ncores, nbC, 1), jnp.float32),
                   jax.ShapeDtypeStruct((ncores, nbC, nbC), jnp.float32)),
        grid=(ncores, npc, hwt),
        in_specs=[pl.BlockSpec((1, nbC, tile),
                               lambda c, n, j: (c * npc + n, 0, j))],
        out_specs=(pl.BlockSpec((1, nbC, 1), lambda c, n, j: (c, 0, 0)),
                   pl.BlockSpec((1, nbC, nbC), lambda c, n, j: (c, 0, 0))),
        compiler_params=pltpu.CompilerParams(
            dimension_semantics=("parallel", "arbitrary", "arbitrary"),
            vmem_limit_bytes=48 * 1024 * 1024),
    )(x3f)

    # Reduce core partials, then fold the nb images back down to C channels.
    s_tot = s.sum(axis=0).reshape(nb, C).sum(axis=0)[:, None]          # (C, 1)
    g_blocks = gram.sum(axis=0).reshape(nb, C, nb, C)
    idx = jnp.arange(nb)
    g_diag = g_blocks[idx, :, idx, :].sum(axis=0)                      # (C, C)

    mean = s_tot / total_m
    # Single-pass covariance: E[xx^T] - mean mean^T.  Fine at 1e-4 tolerances
    # for roughly zero-centered inputs; switch to a shifted/two-pass form if
    # the data has large per-channel offsets.
    cov = g_diag / total_m - mean @ mean.T
    return mean, cov


# ---------------------------------------------------------------------------
# Pass 2: whitening matmul with folded mean / affine:
#   y = blockdiag(w*zca) @ x + offset
# ---------------------------------------------------------------------------
def _whiten_kernel(x_ref, zca_ref, off_ref, o_ref):
    x = x_ref[0].astype(jnp.float32)                       # (nb*C, tile)
    y = jnp.dot(zca_ref[...], x, preferred_element_type=jnp.float32)
    o_ref[0] = (y + off_ref[...]).astype(o_ref.dtype)


def _whiten(x3f, zca_bd, off_bd, tile):
    Nf, nbC, HW = x3f.shape
    hwt = pl.cdiv(HW, tile)
    return pl.pallas_call(
        _whiten_kernel,
        out_shape=jax.ShapeDtypeStruct((Nf, nbC, HW), x3f.dtype),
        grid=(Nf, hwt),
        in_specs=[pl.BlockSpec((1, nbC, tile), lambda n, j: (n, 0, j)),
                  pl.BlockSpec((nbC, nbC), lambda n, j: (0, 0)),
                  pl.BlockSpec((nbC, 1), lambda n, j: (0, 0))],
        out_specs=pl.BlockSpec((1, nbC, tile), lambda n, j: (n, 0, j)),
        compiler_params=pltpu.CompilerParams(
            dimension_semantics=("parallel", "parallel"),
            vmem_limit_bytes=48 * 1024 * 1024),
    )(x3f, zca_bd, off_bd)


def zca_whitening_forward(x, running_mean, running_cov, weight, bias,
                          eps=1e-5, momentum=0.1, training=True, affine=True):
    """Reproduces ZCAWhitening.forward.
    Returns (y, new_running_mean, new_running_cov)."""
    N, C, H, W = x.shape
    HW = H * W

    nb = _pick_fold(N, C, _fold_cap())
    nbC = nb * C
    Nf = N // nb
    # Pure metadata reshape: fold nb images onto the sublane axis.  No dtype
    # cast here (a wrapper astype would be a full extra HBM pass); the kernels
    # upcast each tile in VMEM.
    x3f = x.reshape(Nf, nbC, HW)
    tile = _pick_tile(HW, nbC)

    if training:
        mean, cov = _batch_stats(x3f, nb, C, tile, float(N * HW))
        new_running_mean = (1.0 - momentum) * running_mean + momentum * mean[:, 0]
        new_running_cov = (1.0 - momentum) * running_cov + momentum * cov
    else:
        mean = running_mean[:, None].astype(jnp.float32)
        cov = running_cov.astype(jnp.float32)
        new_running_mean, new_running_cov = running_mean, running_cov

    # ZCA matrix from the eps-regularized covariance.
    # TODO(synk): SVD has no Pallas equivalent; done with XLA linalg (CxC, tiny).
    cov_reg = cov + eps * jnp.eye(C, dtype=cov.dtype)
    U, S, _ = jnp.linalg.svd(cov_reg, full_matrices=False)
    zca = (U * (1.0 / jnp.sqrt(S + eps))[None, :]) @ U.T

    if affine:
        w = weight.reshape(C, 1).astype(jnp.float32)
        b = bias.reshape(C, 1).astype(jnp.float32)
    else:
        w = jnp.ones((C, 1), jnp.float32)
        b = jnp.zeros((C, 1), jnp.float32)

    # Fold affine scale and mean subtraction into the matrix / offset:
    #   y = w * (zca @ (x - mean)) + b = (w*zca) @ x + (b - (w*zca) @ mean)
    zca_w = w * zca                                    # (C, C)
    offset = b - zca_w @ mean                          # (C, 1)

    # Expand to the folded sublane layout: block-diagonal weight, tiled offset
    # (nb*C ~= one native MXU weight tile -> no wasted MXU/vreg occupancy).
    zca_bd = jnp.kron(jnp.eye(nb, dtype=jnp.float32), zca_w)   # (nb*C, nb*C)
    off_bd = jnp.tile(offset, (nb, 1))                          # (nb*C, 1)

    y3f = _whiten(x3f, zca_bd, off_bd, tile)
    y = y3f.reshape(N, C, H, W)
    return y, new_running_mean, new_running_cov


def _reference_forward(x, running_mean, running_cov, weight, bias,
                       eps=1e-5, momentum=0.1, training=True, affine=True):
    """Pure-JAX reference mirroring the PyTorch module."""
    N, C, H, W = x.shape
    x_flat = jnp.transpose(x, (1, 0, 2, 3)).reshape(C, -1)
    if training:
        mean = jnp.mean(x_flat, axis=1, keepdims=True)
        xc = x_flat - mean
        cov = xc @ xc.T / float(xc.shape[1])
        new_rm = (1.0 - momentum) * running_mean + momentum * mean[:, 0]
        new_rc = (1.0 - momentum) * running_cov + momentum * cov
    else:
        mean = running_mean[:, None]
        xc = x_flat - mean
        cov = running_cov
        new_rm, new_rc = running_mean, running_cov
    cov_reg = cov + eps * jnp.eye(C, dtype=cov.dtype)
    U, S, _ = jnp.linalg.svd(cov_reg, full_matrices=False)
    zca = U @ jnp.diag(1.0 / jnp.sqrt(S + eps)) @ U.T
    y = (zca @ xc).reshape(C, N, H, W).transpose(1, 0, 2, 3)
    if affine:
        y = y * weight + bias
    return y, new_rm, new_rc


if __name__ == "__main__":
    num_features = 4
    N, C, H, W = 2, num_features, 16, 16

    key = jax.random.PRNGKey(0)
    x = jax.random.normal(key, (N, C, H, W), dtype=jnp.float32)

    # Deterministic parameter / buffer init, matching ZCAWhitening.__init__.
    running_mean = jnp.zeros((num_features,), jnp.float32)
    running_cov = jnp.eye(num_features, dtype=jnp.float32)
    weight = jnp.ones((1, num_features, 1, 1), jnp.float32)
    bias = jnp.zeros((1, num_features, 1, 1), jnp.float32)

    # --- training mode ---
    y, new_rm, new_rc = zca_whitening_forward(
        x, running_mean, running_cov, weight, bias,
        eps=1e-5, momentum=0.1, training=True, affine=True)
    jax.block_until_ready((y, new_rm, new_rc))

    y_ref, rm_ref, rc_ref = _reference_forward(
        x, running_mean, running_cov, weight, bias,
        eps=1e-5, momentum=0.1, training=True, affine=True)
    assert y.shape == (N, C, H, W)
    assert jnp.allclose(y, y_ref, atol=1e-4, rtol=1e-4)
    assert jnp.allclose(new_rm, rm_ref, atol=1e-5, rtol=1e-5)
    assert jnp.allclose(new_rc, rc_ref, atol=1e-5, rtol=1e-5)

    # --- eval mode (uses running buffers, no stats pass) ---
    y_e, _, _ = zca_whitening_forward(
        x, new_rm, new_rc, weight, bias,
        eps=1e-5, momentum=0.1, training=False, affine=True)
    jax.block_until_ready(y_e)
    y_e_ref, _, _ = _reference_forward(
        x, new_rm, new_rc, weight, bias,
        eps=1e-5, momentum=0.1, training=False, affine=True)
    assert jnp.allclose(y_e, y_e_ref, atol=1e-4, rtol=1e-4)

    print("KERNEL_OK")
</pallas_src>

<mosaic_0001>
module attributes {stable_mosaic.version = 11 : i64} {
  func.func @_stats_kernel(%arg0: i32, %arg1: i32, %arg2: i32, %arg3: memref<1x8x256xf32, #tpu.memory_space<vmem>>, %arg4: memref<1x8x1xf32, #tpu.memory_space<vmem>>, %arg5: memref<1x8x8xf32, #tpu.memory_space<vmem>>) attributes {dimension_semantics = [#tpu.dimension_semantics<parallel>, #tpu.dimension_semantics<arbitrary>, #tpu.dimension_semantics<arbitrary>], iteration_bounds = array<i64: 1, 1, 1>, scalar_prefetch = 0 : i64, scratch_operands = 0 : i64, tpu.core_type = #tpu.core_type<tc>, window_params = [{transform_indices = @transform_0, window_bounds = array<i64: 1, 8, 256>}, {transform_indices = @transform_1, window_bounds = array<i64: 1, 8, 1>}, {transform_indices = @transform_2, window_bounds = array<i64: 1, 8, 8>}]} {
    %c0_i32 = arith.constant 0 : i32
    %0 = arith.cmpi eq, %arg1, %c0_i32 : i32
    %c0_i32_0 = arith.constant 0 : i32
    %1 = arith.cmpi eq, %arg2, %c0_i32_0 : i32
    %2 = arith.andi %0, %1 : i1
    %3 = arith.extui %2 : i1 to i32
    %c0_i32_1 = arith.constant 0 : i32
    %4 = arith.cmpi ne, %3, %c0_i32_1 : i32
    scf.if %4 {
      %cst_17 = arith.constant 0.000000e+00 : f32
      %22 = vector.broadcast %cst_17 : f32 to vector<1x8x1xf32>
      %c0_18 = arith.constant 0 : index
      %c0_19 = arith.constant 0 : index
      %c0_20 = arith.constant 0 : index
      %23 = vector.load %arg4[%c0_18, %c0_19, %c0_20] : memref<1x8x1xf32, #tpu.memory_space<vmem>>, vector<1x8x1xf32>
      tpu.vector_store %arg4[%c0_18, %c0_19, %c0_20], %22 {strides = array<i32>} : memref<1x8x1xf32, #tpu.memory_space<vmem>>, vector<1x8x1xf32>,
      %cst_21 = arith.constant 0.000000e+00 : f32
      %24 = vector.broadcast %cst_21 : f32 to vector<1x8x8xf32>
      %c0_22 = arith.constant 0 : index
      %c0_23 = arith.constant 0 : index
      %c0_24 = arith.constant 0 : index
      %25 = vector.load %arg5[%c0_22, %c0_23, %c0_24] : memref<1x8x8xf32, #tpu.memory_space<vmem>>, vector<1x8x8xf32>
      tpu.vector_store %arg5[%c0_22, %c0_23, %c0_24], %24 {strides = array<i32>} : memref<1x8x8xf32, #tpu.memory_space<vmem>>, vector<1x8x8xf32>,
    } else {
    }
    %c0 = arith.constant 0 : index
    %c0_2 = arith.constant 0 : index
    %c0_3 = arith.constant 0 : index
    %5 = vector.load %arg3[%c0, %c0_2, %c0_3] : memref<1x8x256xf32, #tpu.memory_space<vmem>>, vector<1x8x256xf32>
    %6 = vector.shape_cast %5 : vector<1x8x256xf32> to vector<8x256xf32>
    %c0_4 = arith.constant 0 : index
    %c0_5 = arith.constant 0 : index
    %c0_6 = arith.constant 0 : index
    %7 = vector.load %arg5[%c0_4, %c0_5, %c0_6] : memref<1x8x8xf32, #tpu.memory_space<vmem>>, vector<1x8x8xf32>
    %8 = vector.shape_cast %7 : vector<1x8x8xf32> to vector<8x8xf32>
    %cst = arith.constant dense<0.000000e+00> : vector<8x8xf32>
    %9 = tpu.matmul %6, %6, %cst {dimension_numbers = #tpu.dot_dimension_numbers<[1], [1], [0], [0], [0, 0, 1, 0], [], []>} : vector<8x256xf32>, vector<8x256xf32>, vector<8x8xf32> -> vector<8x8xf32>
    %10 = arith.addf %8, %9 : vector<8x8xf32>
    %c0_7 = arith.constant 0 : index
    %c0_8 = arith.constant 0 : index
    %c0_9 = arith.constant 0 : index
    %11 = vector.load %arg5[%c0_7, %c0_8, %c0_9] : memref<1x8x8xf32, #tpu.memory_space<vmem>>, vector<1x8x8xf32>
    %12 = vector.shape_cast %11 : vector<1x8x8xf32> to vector<8x8xf32>
    %13 = vector.shape_cast %10 : vector<8x8xf32> to vector<1x8x8xf32>
    tpu.vector_store %arg5[%c0_7, %c0_8, %c0_9], %13 {strides = array<i32>} : memref<1x8x8xf32, #tpu.memory_space<vmem>>, vector<1x8x8xf32>,
    %c0_10 = arith.constant 0 : index
    %c0_11 = arith.constant 0 : index
    %c0_12 = arith.constant 0 : index
    %14 = vector.load %arg4[%c0_10, %c0_11, %c0_12] : memref<1x8x1xf32, #tpu.memory_space<vmem>>, vector<1x8x1xf32>
    %15 = vector.shape_cast %14 : vector<1x8x1xf32> to vector<8x1xf32>
    %cst_13 = arith.constant dense<0.000000e+00> : vector<8xf32>
    %16 = vector.multi_reduction <add>, %6, %cst_13 [1] : vector<8x256xf32> to vector<8xf32>
    %17 = vector.shape_cast %16 : vector<8xf32> to vector<8x1xf32>
    %18 = arith.addf %15, %17 : vector<8x1xf32>
    %c0_14 = arith.constant 0 : index
    %c0_15 = arith.constant 0 : index
    %c0_16 = arith.constant 0 : index
    %19 = vector.load %arg4[%c0_14, %c0_15, %c0_16] : memref<1x8x1xf32, #tpu.memory_space<vmem>>, vector<1x8x1xf32>
    %20 = vector.shape_cast %19 : vector<1x8x1xf32> to vector<8x1xf32>
    %21 = vector.shape_cast %18 : vector<8x1xf32> to vector<1x8x1xf32>
    tpu.vector_store %arg4[%c0_14, %c0_15, %c0_16], %21 {strides = array<i32>} : memref<1x8x1xf32, #tpu.memory_space<vmem>>, vector<1x8x1xf32>,
    return
  }
  func.func @transform_0(%arg0: i32, %arg1: i32, %arg2: i32) -> (i32, i32, i32) {
    %c1_i32 = arith.constant 1 : i32
    %0 = arith.muli %arg0, %c1_i32 : i32
    %1 = arith.addi %0, %arg1 : i32
    %c0_i32 = arith.constant 0 : i32
    %c0_i32_0 = arith.constant 0 : i32
    return %1, %c0_i32, %arg2 : i32, i32, i32
  }
  func.func @transform_1(%arg0: i32, %arg1: i32, %arg2: i32) -> (i32, i32, i32) {
    %c0_i32 = arith.constant 0 : i32
    %c0_i32_0 = arith.constant 0 : i32
    %c0_i32_1 = arith.constant 0 : i32
    return %arg0, %c0_i32, %c0_i32_0 : i32, i32, i32
  }
  func.func @transform_2(%arg0: i32, %arg1: i32, %arg2: i32) -> (i32, i32, i32) {
    %c0_i32 = arith.constant 0 : i32
    %c0_i32_0 = arith.constant 0 : i32
    %c0_i32_1 = arith.constant 0 : i32
    return %arg0, %c0_i32, %c0_i32_0 : i32, i32, i32
  }
}

</mosaic_0001>

<llo_original>
// kernel: tpu_custom_call.1
$region0: #{tpu_custom_call.1}
  #allocation0 [shape = 'u32[]', space=smem, size = 0x4, offset = 0x4, fixed_abs, tag = 'smem constant byte address 0x4 - core index']
  #allocation1 [shape = 'u32[144,128]{1,0:T(1,128)}', space=vmem, size = 0x12000, scoped, tag = 'internal scratch']
  %s0 = inlined_call_operand.hbm [shape: f32[1,8,256], index: 0, kind: input, shape index: {}]
  %s1 = inlined_call_operand.vmem [shape: f32[1,8,1], index: 1, kind: output, shape index: {0}]
  %s2 = inlined_call_operand.hbm [shape: f32[1,8,8], index: 2, kind: output, shape index: {1}]
  %3 = xla_tuple %s1, %s2
  %s4 = sld [smem:[#allocation0]]
  $region30: #{tpu_custom_call.1} parent=0
    _
  %s6 = ssub.s32 1, %s4
  %s7 = scalar_select 0, %s6, %s4
  $region1: #{tpu_custom_call.1} parent=0
    #allocation2 [shape = 'u8[8192]{0}', space=vmem, size = 0x2000, scoped, tag = 'input window, operand 0, single buffered']
    #allocation3 [shape = 's32[1]{0}', space=sflag, size = 0x4, scoped, tag = 'scoped memory for tpu_custom_call.1']
    #allocation4 [shape = 's32[1]{0}', space=sflag, size = 0x4, scoped, tag = 'scoped memory for tpu_custom_call.1']
    #allocation5 [shape = 'u8[4096]{0}', space=vmem, size = 0x1000, scoped, tag = 'output window, operand 1, single buffered']
    %8 = vsyncpa [#allocation3], 0
    %9 = vsyncpa [#allocation4], 0
    // Predicated region
    $region2: #{tpu_custom_call.1} parent=1 // pred_check
      _
    $region3: #{tpu_custom_call.1} parent=1 // pred_check_branch
      %11 = sbr.rel (0) target = $region5
    $region4: #{tpu_custom_call.1} parent=1 // pred_region
      %s12 = sadd.s32 0, 0
      %s14 = ssub.s32 256, 256
      %15 = vsyncadd [#allocation3], %s14
      %s16 = smul.addr %s12, 2
      %s17 = smul.addr %s16, 128
      %s18 = scalar_lea.hbm %s0, %s17
      %s20 = sshll.u32 [#allocation2], 4
      %s21 = int_to_ptr.vmem [resolvable:$true] %s20
      %23 = dma.hbm_to_vmem [thread:$0]  %s18, 256, %s21, [#allocation3]
    $region5: #{tpu_custom_call.1} parent=1 // pred_fallthru
      _
    // Predicated region
    $region6: #{tpu_custom_call.1} parent=1 // pred_check
      _
    $region7: #{tpu_custom_call.1} parent=1 // pred_check_branch
      %25 = sbr.rel (0) target = $region9
    $region8: #{tpu_custom_call.1} parent=1 // pred_region
      %26 = dma.done [#allocation3], 256
    $region9: #{tpu_custom_call.1} parent=1 // pred_fallthru
      _
    %s27 = sadd.s32 0, 0
    %p28 = scmp.eq.s32.totalorder 0, 0
    %p29 = scmp.eq.s32.totalorder 0, 0
    %p30 = pnand %p28, %p29
    %p31 = pneg %p30
    // Predicated region
    $region10: #{tpu_custom_call.1} parent=1 // pred_check
      _
    $region11: #{tpu_custom_call.1} parent=1 // pred_check_branch
      %33 = sbr.rel (%p30) target = $region13
    $region12: #{tpu_custom_call.1} parent=1 // pred_region
      %vm34 = vcmask 7168
      %35 = vst.msk [vmem:[%s1] sm:$0xff] %vm34, 0.0
      %vm36 = vcmask 64512
      %37 = vst.msk [vmem:[#allocation5] sm:$0xff] %vm36, 0.0
    $region13: #{tpu_custom_call.1} parent=1 // pred_fallthru
      _
    %v38 = vld [vmem:[#allocation2] sm:$0xff]
    %v39 = vld [vmem:[#allocation2 + $0x8] sm:$0xff]
    %v40 = vld [vmem:[#allocation5] sm:$0xff]
    %41 = vmatprep.subr.mxu0 0.0
    %42 = vmatpush1.xpose.msra.mxu0 0.0
    %43 = vmatprep.subr.mxu0 0.0
    %44 = vmatpush1.xpose.msra.mxu0 0.0
    %45 = vmatprep.subr.mxu0 0.0
    %46 = vmatpush1.xpose.msra.mxu0 0.0
    %47 = vmatprep.subr.mxu0 0.0
    %48 = vmatpush1.xpose.msra.mxu0 0.0
    %49 = vmatprep.subr.mxu0 0.0
    %50 = vmatpush1.xpose.msra.mxu0 0.0
    %51 = vmatprep.subr.mxu0 0.0
    %52 = vmatpush1.xpose.msra.mxu0 0.0
    %53 = vmatprep.subr.mxu0 0.0
    %54 = vmatpush1.xpose.msra.mxu0 0.0
    %55 = vmatprep.subr.mxu0 0.0
    %56 = vmatpush1.xpose.msra.mxu0 0.0
    %57 = vmatprep.subr.mxu0 0.0
    %58 = vmatpush1.xpose.msra.mxu0 0.0
    %59 = vmatprep.subr.mxu0 0.0
    %60 = vmatpush1.xpose.msra.mxu0 0.0
    %61 = vmatprep.subr.mxu0 0.0
    %62 = vmatpush1.xpose.msra.mxu0 0.0
    %63 = vmatprep.subr.mxu0 0.0
    %64 = vmatpush1.xpose.msra.mxu0 0.0
    %65 = vmatprep.subr.mxu0 0.0
    %66 = vmatpush1.xpose.msra.mxu0 0.0
    %67 = vmatprep.subr.mxu0 0.0
    %68 = vmatpush1.xpose.msra.mxu0 0.0
    %69 = vmatprep.subr.mxu0 0.0
    %70 = vmatpush1.xpose.msra.mxu0 0.0
    %71 = vmatprep.subr.mxu0 %v39
    %72 = vmatpush1.xpose.msra.mxu0 %v38
    %73 = vmatprep.subr.mxu0 0.0
    %74 = vmatpush2.xpose.msra.mxu0 0.0
    %75 = vmatprep.subr.mxu0 0.0
    %76 = vmatpush2.xpose.msra.mxu0 0.0
    %77 = vmatprep.subr.mxu0 0.0
    %78 = vmatpush2.xpose.msra.mxu0 0.0
    %79 = vmatprep.subr.mxu0 0.0
    %80 = vmatpush2.xpose.msra.mxu0 0.0
    %81 = vmatprep.subr.mxu0 0.0
    %82 = vmatpush2.xpose.msra.mxu0 0.0
    %83 = vmatprep.subr.mxu0 0.0
    %84 = vmatpush2.xpose.msra.mxu0 0.0
    %85 = vmatprep.subr.mxu0 0.0
    %86 = vmatpush2.xpose.msra.mxu0 0.0
    %87 = vmatprep.subr.mxu0 0.0
    %88 = vmatpush2.xpose.msra.mxu0 0.0
    %89 = vmatprep.subr.mxu0 0.0
    %90 = vmatpush2.xpose.msra.mxu0 0.0
    %91 = vmatprep.subr.mxu0 0.0
    %92 = vmatpush2.xpose.msra.mxu0 0.0
    %93 = vmatprep.subr.mxu0 0.0
    %94 = vmatpush2.xpose.msra.mxu0 0.0
    %95 = vmatprep.subr.mxu0 0.0
    %96 = vmatpush2.xpose.msra.mxu0 0.0
    %97 = vmatprep.subr.mxu0 0.0
    %98 = vmatpush2.xpose.msra.mxu0 0.0
    %99 = vmatprep.subr.mxu0 0.0
    %100 = vmatpush2.xpose.msra.mxu0 0.0
    %101 = vmatprep.subr.mxu0 0.0
    %102 = vmatpush2.xpose.msra.mxu0 0.0
    %103 = vmatprep.subr.mxu0 0.0
    %104 = vmatpush2.xpose.msra.mxu0 0.0
    %105 = vmatprep.mubr.f32.mxu0 %v39
    %106 = vmatmul.mubr.f32.gmra.mxu0 %v38
    %v107 = vpop.f32.mrf.mxu0
    %v108 = vadd.f32 0.0, %v107
    %v109 = vpop.f32.mrf.mxu0
    %110 = vdwg.mxu0
    %v111 = vadd.f32 %v40, %v108
    %vm112 = vcmask 64512
    %113 = vst.msk [vmem:[#allocation5] sm:$0xff] %vm112, %v111
    %v114 = vld [vmem:[%s1] sm:$0xff]
    %v115 = vadd.f32 %v38, %v39
    %116 = vadd.xlane.f32.xlu0 %v115
    %v117 = vpop.xlane.xlu0 %116
    %v118 = vadd.f32 %v114, %v117
    %vm119 = vcmask 7168
    %120 = vst.msk [vmem:[%s1] sm:$0xff] %vm119, %v118
    // Predicated region
    $region14: #{tpu_custom_call.1} parent=1 // pred_check
      _
    $region15: #{tpu_custom_call.1} parent=1 // pred_check_branch
      %122 = sbr.rel (0) target = $region17
    $region16: #{tpu_custom_call.1} parent=1 // pred_region
      _
    $region17: #{tpu_custom_call.1} parent=1 // pred_fallthru
      _
    // Predicated region
    $region18: #{tpu_custom_call.1} parent=1 // pred_check
      _
    $region19: #{tpu_custom_call.1} parent=1 // pred_check_branch
      %124 = sbr.rel (0) target = $region21
    $region20: #{tpu_custom_call.1} parent=1 // pred_region
      %s126 = ssub.s32 128, 128
      %127 = vsyncadd [#allocation4], %s126
      %s129 = sshll.u32 [#allocation5], 4
      %s130 = int_to_ptr.vmem [resolvable:$true] %s129
      %132 = dma.vmem_to_hbm [thread:$0]  %s130, 128, %s2, [#allocation4]
    $region21: #{tpu_custom_call.1} parent=1 // pred_fallthru
      _
    // Predicated region
    $region22: #{tpu_custom_call.1} parent=1 // pred_check
      _
    $region23: #{tpu_custom_call.1} parent=1 // pred_check_branch
      %134 = sbr.rel (0) target = $region25
    $region24: #{tpu_custom_call.1} parent=1 // pred_region
      _
    $region25: #{tpu_custom_call.1} parent=1 // pred_fallthru
      _
    // Predicated region
    $region26: #{tpu_custom_call.1} parent=1 // pred_check
      _
    $region27: #{tpu_custom_call.1} parent=1 // pred_check_branch
      %136 = sbr.rel (0) target = $region29
    $region28: #{tpu_custom_call.1} parent=1 // pred_region
      %137 = dma.done [#allocation4], 128
    $region29: #{tpu_custom_call.1} parent=1 // pred_fallthru
      _
    %138 = vsyncpa [#allocation3], 1
    %139 = vsyncpa [#allocation4], 1

</llo_original>
